<compile_context>
chip_gen: v7x
topology: tpu7x:2x2x1
jax: 0.10.0
libtpu: 0.0.40
codegen_flags: <defaults>
</compile_context>

<pallas_src>
import functools
import math

import jax
import jax.numpy as jnp
from jax.experimental import pallas as pl
from jax.experimental.pallas import tpu as pltpu


def _round_up(n, m):
    return ((n + m - 1) // m) * m


def autoencoder_kernel(x_ref, wa_ref, ba_ref, w1_ref, b1_ref, w2_ref, b2_ref,
                       out_ref, *, logit_thresh):
    x = x_ref[...]                                           # (TB, IN_P) f32

    # Encoder gate: (sigmoid(x@Wa+ba) > t)  ==  (x@Wa+ba > logit(t)).
    # Kept in f32 so the binary threshold decision is exact vs the reference.
    a = jnp.dot(x, wa_ref[...], preferred_element_type=jnp.float32) + ba_ref[...]
    gate = (a > logit_thresh).astype(jnp.float32)
    xg = x * gate

    # Encoder.fc1: relu((x*gate) @ W1 + b1)   (bf16 operands, f32 accumulate)
    h = jnp.dot(xg.astype(jnp.bfloat16), w1_ref[...],
                preferred_element_type=jnp.float32) + b1_ref[...]
    h = jnp.maximum(h, 0.0)

    # Decoder.fc1: relu(h @ W2 + b2)          (bf16 operands, f32 accumulate)
    y = jnp.dot(h.astype(jnp.bfloat16), w2_ref[...],
                preferred_element_type=jnp.float32) + b2_ref[...]
    out_ref[...] = jnp.maximum(y, 0.0).astype(out_ref.dtype)


def pad_and_cast_params(params):
    """Zero-pad feature dims to lane-aligned sizes (once) and pre-cast the
    fc1/fc2 weights to bf16. The gate weights stay f32 for an exact threshold."""
    wa, ba = params["wa"], params["ba"]
    w1, b1 = params["w1"], params["b1"]
    w2, b2 = params["w2"], params["b2"]
    inputt, hidden = w1.shape
    in_p = max(_round_up(inputt, 128), 128)
    hid_p = max(_round_up(hidden, 128), 128)

    def pad2(m, rows, cols, dtype=None):
        m = jnp.pad(m, ((0, rows - m.shape[0]), (0, cols - m.shape[1])))
        return m if dtype is None else m.astype(dtype)

    return {
        "inputt": inputt, "hidden": hidden, "in_p": in_p, "hid_p": hid_p,
        "wa": pad2(wa, in_p, in_p),                      # f32 (exact gate path)
        "ba": pad2(ba, 1, in_p),
        "w1": pad2(w1, in_p, hid_p, jnp.bfloat16),
        "b1": pad2(b1, 1, hid_p),
        "w2": pad2(w2, hid_p, in_p, jnp.bfloat16),
        "b2": pad2(b2, 1, in_p),
    }


def autoencoder_forward(x, thresh, padded, *, tb_max=256):
    """x: (..., inputt) f32 (flattened like x.view(-1, inputt)); thresh: float."""
    inputt = padded["inputt"]
    in_p, hid_p = padded["in_p"], padded["hid_p"]

    x2 = jnp.reshape(x, (-1, inputt)).astype(jnp.float32)    # x.view(-1, inputt)
    b = x2.shape[0]
    tb = min(tb_max, _round_up(b, 8))                        # batch tile (>=8, <=256)
    b_pad = _round_up(b, tb)
    x_pad = jnp.pad(x2, ((0, b_pad - b), (0, in_p - inputt)))

    # Fold the sigmoid: sigmoid(a) > t  <=>  a > logit(t) for t in (0,1).
    thresh = float(thresh)
    if thresh <= 0.0:
        logit_thresh = float("-inf")      # sigmoid(a) in (0,1): gate always 1
    elif thresh >= 1.0:
        logit_thresh = float("inf")       # gate always 0
    else:
        logit_thresh = math.log(thresh / (1.0 - thresh))

    kernel = functools.partial(autoencoder_kernel, logit_thresh=logit_thresh)

    out = pl.pallas_call(
        kernel,
        out_shape=jax.ShapeDtypeStruct((b_pad, in_p), jnp.float32),
        grid=(b_pad // tb,),
        in_specs=[
            pl.BlockSpec((tb, in_p),    lambda i: (i, 0)),   # x: batch-tiled
            pl.BlockSpec((in_p, in_p),  lambda i: (0, 0)),   # Wa (VMEM-resident)
            pl.BlockSpec((1, in_p),     lambda i: (0, 0)),   # ba
            pl.BlockSpec((in_p, hid_p), lambda i: (0, 0)),   # W1 (resident, bf16)
            pl.BlockSpec((1, hid_p),    lambda i: (0, 0)),   # b1
            pl.BlockSpec((hid_p, in_p), lambda i: (0, 0)),   # W2 (resident, bf16)
            pl.BlockSpec((1, in_p),     lambda i: (0, 0)),   # b2
        ],
        out_specs=pl.BlockSpec((tb, in_p), lambda i: (i, 0)),
        compiler_params=pltpu.CompilerParams(
            dimension_semantics=("parallel",)),              # 2 TCs on v7x
    )(x_pad, padded["wa"], padded["ba"], padded["w1"], padded["b1"],
      padded["w2"], padded["b2"])

    return out[:b, :inputt]


def init_params(key, inputt, hidden):
    """Deterministic init matching nn.Linear shapes (stored transposed: (in, out))."""
    ks = jax.random.split(key, 6)

    def lin(kw, kb, fan_in, fan_out):
        bound = 1.0 / jnp.sqrt(fan_in)
        w = jax.random.uniform(kw, (fan_in, fan_out), jnp.float32, -bound, bound)
        b = jax.random.uniform(kb, (1, fan_out), jnp.float32, -bound, bound)
        return w, b

    wa, ba = lin(ks[0], ks[1], inputt, inputt)   # Encoder.fca
    w1, b1 = lin(ks[2], ks[3], inputt, hidden)   # Encoder.fc1
    w2, b2 = lin(ks[4], ks[5], hidden, inputt)   # Decoder.fc1
    return {"wa": wa, "ba": ba, "w1": w1, "b1": b1, "w2": w2, "b2": b2}


def reference_forward(x, thresh, p):
    """Pure-JAX f32 reference of the PyTorch forward."""
    x2 = jnp.reshape(x, (-1, p["wa"].shape[0]))
    a = jax.nn.sigmoid(x2 @ p["wa"] + p["ba"])
    gate = (a > thresh).astype(jnp.float32)
    h = jax.nn.relu((x2 * gate) @ p["w1"] + p["b1"])
    return jax.nn.relu(h @ p["w2"] + p["b2"])


if __name__ == "__main__":
    INPUTT, HIDDEN, BATCH = 54, 200, 8   # module defaults: inputt=54, hidden=200
    THRESH = 0.5

    key = jax.random.PRNGKey(0)
    kx, kp = jax.random.split(key)
    x = jax.random.normal(kx, (BATCH, INPUTT), dtype=jnp.float32)
    params = init_params(kp, INPUTT, HIDDEN)
    padded = pad_and_cast_params(params)

    out = autoencoder_forward(x, THRESH, padded)
    out = jax.block_until_ready(out)

    ref = reference_forward(x, THRESH, params)
    assert out.shape == (BATCH, INPUTT)
    max_err = float(jnp.max(jnp.abs(out - ref)))
    # Gate path is exact f32; only fc1/fc2 matmuls use bf16 operands, so a
    # modest tolerance vs the f32 reference is appropriate.
    assert jnp.allclose(out, ref, atol=5e-2, rtol=5e-2), \
        f"mismatch vs reference (max abs err {max_err})"

    print("KERNEL_OK")
</pallas_src>

<mosaic_0001>
module attributes {stable_mosaic.version = 11 : i64} {
  func.func @autoencoder_kernel(%arg0: i32, %arg1: memref<8x128xf32, #tpu.memory_space<vmem>>, %arg2: memref<128x128xf32, #tpu.memory_space<vmem>>, %arg3: memref<1x128xf32, #tpu.memory_space<vmem>>, %arg4: memref<128x256xbf16, #tpu.memory_space<vmem>>, %arg5: memref<1x256xf32, #tpu.memory_space<vmem>>, %arg6: memref<256x128xbf16, #tpu.memory_space<vmem>>, %arg7: memref<1x128xf32, #tpu.memory_space<vmem>>, %arg8: memref<8x128xf32, #tpu.memory_space<vmem>>) attributes {dimension_semantics = [#tpu.dimension_semantics<parallel>], iteration_bounds = array<i64: 1>, scalar_prefetch = 0 : i64, scratch_operands = 0 : i64, tpu.core_type = #tpu.core_type<tc>, window_params = [{transform_indices = @transform_0, window_bounds = array<i64: 8, 128>}, {pipeline_mode = #tpu.pipeline_mode<synchronous>, transform_indices = @transform_1, window_bounds = array<i64: 128, 128>}, {pipeline_mode = #tpu.pipeline_mode<synchronous>, transform_indices = @transform_2, window_bounds = array<i64: 1, 128>}, {pipeline_mode = #tpu.pipeline_mode<synchronous>, transform_indices = @transform_3, window_bounds = array<i64: 128, 256>}, {pipeline_mode = #tpu.pipeline_mode<synchronous>, transform_indices = @transform_4, window_bounds = array<i64: 1, 256>}, {pipeline_mode = #tpu.pipeline_mode<synchronous>, transform_indices = @transform_5, window_bounds = array<i64: 256, 128>}, {pipeline_mode = #tpu.pipeline_mode<synchronous>, transform_indices = @transform_6, window_bounds = array<i64: 1, 128>}, {transform_indices = @transform_7, window_bounds = array<i64: 8, 128>}]} {
    %c0 = arith.constant 0 : index
    %c0_0 = arith.constant 0 : index
    %0 = vector.load %arg1[%c0, %c0_0] : memref<8x128xf32, #tpu.memory_space<vmem>>, vector<8x128xf32>
    %c0_1 = arith.constant 0 : index
    %c0_2 = arith.constant 0 : index
    %1 = vector.load %arg2[%c0_1, %c0_2] : memref<128x128xf32, #tpu.memory_space<vmem>>, vector<128x128xf32>
    %cst = arith.constant dense<0.000000e+00> : vector<8x128xf32>
    %2 = tpu.matmul %0, %1, %cst {dimension_numbers = #tpu.dot_dimension_numbers<[1], [0], [0], [1], [0, 0, 1, 1], [], []>} : vector<8x128xf32>, vector<128x128xf32>, vector<8x128xf32> -> vector<8x128xf32>
    %c0_3 = arith.constant 0 : index
    %c0_4 = arith.constant 0 : index
    %3 = vector.load %arg3[%c0_3, %c0_4] : memref<1x128xf32, #tpu.memory_space<vmem>>, vector<1x128xf32>
    %4 = vector.broadcast %3 : vector<1x128xf32> to vector<8x128xf32>
    %5 = arith.addf %2, %4 : vector<8x128xf32>
    %cst_5 = arith.constant 0.000000e+00 : f32
    %6 = vector.broadcast %cst_5 : f32 to vector<8x128xf32>
    %7 = arith.cmpf ogt, %5, %6 : vector<8x128xf32>
    %8 = arith.extui %7 : vector<8x128xi1> to vector<8x128xi32>
    %9 = arith.sitofp %8 : vector<8x128xi32> to vector<8x128xf32>
    %10 = arith.mulf %0, %9 : vector<8x128xf32>
    %11 = arith.truncf %10 : vector<8x128xf32> to vector<8x128xbf16>
    %c0_6 = arith.constant 0 : index
    %c0_7 = arith.constant 0 : index
    %12 = vector.load %arg4[%c0_6, %c0_7] : memref<128x256xbf16, #tpu.memory_space<vmem>>, vector<128x256xbf16>
    %cst_8 = arith.constant dense<0.000000e+00> : vector<8x256xf32>
    %13 = tpu.matmul %11, %12, %cst_8 {dimension_numbers = #tpu.dot_dimension_numbers<[1], [0], [0], [1], [0, 0, 1, 1], [], []>} : vector<8x128xbf16>, vector<128x256xbf16>, vector<8x256xf32> -> vector<8x256xf32>
    %c0_9 = arith.constant 0 : index
    %c0_10 = arith.constant 0 : index
    %14 = vector.load %arg5[%c0_9, %c0_10] : memref<1x256xf32, #tpu.memory_space<vmem>>, vector<1x256xf32>
    %15 = vector.broadcast %14 : vector<1x256xf32> to vector<8x256xf32>
    %16 = arith.addf %13, %15 : vector<8x256xf32>
    %cst_11 = arith.constant 0.000000e+00 : f32
    %17 = vector.broadcast %cst_11 : f32 to vector<8x256xf32>
    %18 = arith.maximumf %16, %17 : vector<8x256xf32>
    %19 = arith.truncf %18 : vector<8x256xf32> to vector<8x256xbf16>
    %c0_12 = arith.constant 0 : index
    %c0_13 = arith.constant 0 : index
    %20 = vector.load %arg6[%c0_12, %c0_13] : memref<256x128xbf16, #tpu.memory_space<vmem>>, vector<256x128xbf16>
    %cst_14 = arith.constant dense<0.000000e+00> : vector<8x128xf32>
    %21 = tpu.matmul %19, %20, %cst_14 {dimension_numbers = #tpu.dot_dimension_numbers<[1], [0], [0], [1], [0, 0, 1, 1], [], []>} : vector<8x256xbf16>, vector<256x128xbf16>, vector<8x128xf32> -> vector<8x128xf32>
    %c0_15 = arith.constant 0 : index
    %c0_16 = arith.constant 0 : index
    %22 = vector.load %arg7[%c0_15, %c0_16] : memref<1x128xf32, #tpu.memory_space<vmem>>, vector<1x128xf32>
    %23 = vector.broadcast %22 : vector<1x128xf32> to vector<8x128xf32>
    %24 = arith.addf %21, %23 : vector<8x128xf32>
    %cst_17 = arith.constant 0.000000e+00 : f32
    %25 = vector.broadcast %cst_17 : f32 to vector<8x128xf32>
    %26 = arith.maximumf %24, %25 : vector<8x128xf32>
    %c0_18 = arith.constant 0 : index
    %c0_19 = arith.constant 0 : index
    %27 = vector.load %arg8[%c0_18, %c0_19] : memref<8x128xf32, #tpu.memory_space<vmem>>, vector<8x128xf32>
    tpu.vector_store %arg8[%c0_18, %c0_19], %26 {strides = array<i32>} : memref<8x128xf32, #tpu.memory_space<vmem>>, vector<8x128xf32>,
    return
  }
  func.func @transform_0(%arg0: i32) -> (i32, i32) {
    %c0_i32 = arith.constant 0 : i32
    %c0_i32_0 = arith.constant 0 : i32
    return %arg0, %c0_i32 : i32, i32
  }
  func.func @transform_1(%arg0: i32) -> (i32, i32) {
    %c0_i32 = arith.constant 0 : i32
    %c0_i32_0 = arith.constant 0 : i32
    %c0_i32_1 = arith.constant 0 : i32
    return %c0_i32, %c0_i32_0 : i32, i32
  }
  func.func @transform_2(%arg0: i32) -> (i32, i32) {
    %c0_i32 = arith.constant 0 : i32
    %c0_i32_0 = arith.constant 0 : i32
    %c0_i32_1 = arith.constant 0 : i32
    return %c0_i32, %c0_i32_0 : i32, i32
  }
  func.func @transform_3(%arg0: i32) -> (i32, i32) {
    %c0_i32 = arith.constant 0 : i32
    %c0_i32_0 = arith.constant 0 : i32
    %c0_i32_1 = arith.constant 0 : i32
    return %c0_i32, %c0_i32_0 : i32, i32
  }
  func.func @transform_4(%arg0: i32) -> (i32, i32) {
    %c0_i32 = arith.constant 0 : i32
    %c0_i32_0 = arith.constant 0 : i32
    %c0_i32_1 = arith.constant 0 : i32
    return %c0_i32, %c0_i32_0 : i32, i32
  }
  func.func @transform_5(%arg0: i32) -> (i32, i32) {
    %c0_i32 = arith.constant 0 : i32
    %c0_i32_0 = arith.constant 0 : i32
    %c0_i32_1 = arith.constant 0 : i32
    return %c0_i32, %c0_i32_0 : i32, i32
  }
  func.func @transform_6(%arg0: i32) -> (i32, i32) {
    %c0_i32 = arith.constant 0 : i32
    %c0_i32_0 = arith.constant 0 : i32
    %c0_i32_1 = arith.constant 0 : i32
    return %c0_i32, %c0_i32_0 : i32, i32
  }
  func.func @transform_7(%arg0: i32) -> (i32, i32) {
    %c0_i32 = arith.constant 0 : i32
    %c0_i32_0 = arith.constant 0 : i32
    return %arg0, %c0_i32 : i32, i32
  }
}

</mosaic_0001>

<llo_original>
// kernel: tpu_custom_call.1
$region0: #{tpu_custom_call.1}
  #allocation0 [shape = 'u32[]', space=smem, size = 0x4, offset = 0x4, fixed_abs, tag = 'smem constant byte address 0x4 - core index']
  #allocation1 [shape = 'u32[144,128]{1,0:T(1,128)}', space=vmem, size = 0x12000, scoped, tag = 'internal scratch']
  %s0 = inlined_call_operand.hbm [shape: f32[8,128], index: 0, kind: input, shape index: {}]
  %s1 = inlined_call_operand.hbm [shape: f32[128,128], index: 1, kind: input, shape index: {}]
  %s2 = inlined_call_operand.vmem [shape: f32[1,128], index: 2, kind: input, shape index: {}]
  %s3 = inlined_call_operand.hbm [shape: bf16[128,256], index: 3, kind: input, shape index: {}]
  %s4 = inlined_call_operand.vmem [shape: f32[1,256], index: 4, kind: input, shape index: {}]
  %s5 = inlined_call_operand.hbm [shape: bf16[256,128], index: 5, kind: input, shape index: {}]
  %s6 = inlined_call_operand.vmem [shape: f32[1,128], index: 6, kind: input, shape index: {}]
  %s7 = inlined_call_operand.hbm [shape: f32[8,128], index: 7, kind: output, shape index: {}]
  %s8 = sld [smem:[#allocation0]]
  $region54: #{tpu_custom_call.1} parent=0
    _
  %s10 = ssub.s32 1, %s8
  %s11 = scalar_select 0, %s10, %s8
  $region1: #{tpu_custom_call.1} parent=0
    #allocation2 [shape = 'u8[4096]{0}', space=vmem, size = 0x1000, scoped, tag = 'input window, operand 0, single buffered']
    #allocation3 [shape = 's32[1]{0}', space=sflag, size = 0x4, scoped, tag = 'scoped memory for tpu_custom_call.1']
    #allocation4 [shape = 's32[1]{0}', space=sflag, size = 0x4, scoped, tag = 'scoped memory for tpu_custom_call.1']
    #allocation5 [shape = 'u8[65536]{0}', space=vmem, size = 0x10000, scoped, tag = 'input window, operand 1, single buffered']
    #allocation6 [shape = 's32[1]{0}', space=sflag, size = 0x4, scoped, tag = 'scoped memory for tpu_custom_call.1']
    #allocation7 [shape = 'u8[65536]{0}', space=vmem, size = 0x10000, scoped, tag = 'input window, operand 3, single buffered']
    #allocation8 [shape = 'u8[65536]{0}', space=vmem, size = 0x10000, scoped, tag = 'input window, operand 5, single buffered']
    #allocation9 [shape = 's32[1]{0}', space=sflag, size = 0x4, scoped, tag = 'scoped memory for tpu_custom_call.1']
    #allocation10 [shape = 'u8[4096]{0}', space=vmem, size = 0x1000, scoped, tag = 'output window, operand 0, single buffered']
    %12 = vsyncpa [#allocation3], 0
    %13 = vsyncpa [#allocation6], 0
    %14 = vsyncpa [#allocation9], 0
    %15 = vsyncpa [#allocation4], 0
    // Predicated region
    $region2: #{tpu_custom_call.1} parent=1 // pred_check
      _
    $region3: #{tpu_custom_call.1} parent=1 // pred_check_branch
      %17 = sbr.rel (0) target = $region5
    $region4: #{tpu_custom_call.1} parent=1 // pred_region
      %s19 = ssub.s32 128, 128
      %20 = vsyncadd [#allocation3], %s19
      %s22 = sshll.u32 [#allocation2], 4
      %s23 = int_to_ptr.vmem [resolvable:$true] %s22
      %25 = dma.hbm_to_vmem [thread:$0]  %s0, 128, %s23, [#allocation3]
    $region5: #{tpu_custom_call.1} parent=1 // pred_fallthru
      _
    // Predicated region
    $region6: #{tpu_custom_call.1} parent=1 // pred_check
      _
    $region7: #{tpu_custom_call.1} parent=1 // pred_check_branch
      %27 = sbr.rel (0) target = $region9
    $region8: #{tpu_custom_call.1} parent=1 // pred_region
      %s29 = ssub.s32 2048, 2048
      %30 = vsyncadd [#allocation6], %s29
      %s31 = sshll.u32 [#allocation5], 4
      %s32 = int_to_ptr.vmem [resolvable:$true] %s31
      %37 = dma.hbm_to_vmem [thread:$0]  %s1, 2048, %s32, [#allocation6], 128, 128, 8
    $region9: #{tpu_custom_call.1} parent=1 // pred_fallthru
      _
    // Predicated region
    $region10: #{tpu_custom_call.1} parent=1 // pred_check
      _
    $region11: #{tpu_custom_call.1} parent=1 // pred_check_branch
      %39 = sbr.rel (0) target = $region13
    $region12: #{tpu_custom_call.1} parent=1 // pred_region
      _
    $region13: #{tpu_custom_call.1} parent=1 // pred_fallthru
      _
    // Predicated region
    $region14: #{tpu_custom_call.1} parent=1 // pred_check
      _
    $region15: #{tpu_custom_call.1} parent=1 // pred_check_branch
      %41 = sbr.rel (0) target = $region17
    $region16: #{tpu_custom_call.1} parent=1 // pred_region
      %s43 = ssub.s32 2048, 2048
      %44 = vsyncadd [#allocation6], %s43
      %s45 = sshll.u32 [#allocation7], 4
      %s46 = int_to_ptr.vmem [resolvable:$true] %s45
      %51 = dma.hbm_to_vmem [thread:$0]  %s3, 2048, %s46, [#allocation6], 128, 128, 8
    $region17: #{tpu_custom_call.1} parent=1 // pred_fallthru
      _
    // Predicated region
    $region18: #{tpu_custom_call.1} parent=1 // pred_check
      _
    $region19: #{tpu_custom_call.1} parent=1 // pred_check_branch
      %53 = sbr.rel (0) target = $region21
    $region20: #{tpu_custom_call.1} parent=1 // pred_region
      _
    $region21: #{tpu_custom_call.1} parent=1 // pred_fallthru
      _
    // Predicated region
    $region22: #{tpu_custom_call.1} parent=1 // pred_check
      _
    $region23: #{tpu_custom_call.1} parent=1 // pred_check_branch
      %55 = sbr.rel (0) target = $region25
    $region24: #{tpu_custom_call.1} parent=1 // pred_region
      %s57 = ssub.s32 2048, 2048
      %58 = vsyncadd [#allocation9], %s57
      %s59 = sshll.u32 [#allocation8], 4
      %s60 = int_to_ptr.vmem [resolvable:$true] %s59
      %65 = dma.hbm_to_vmem [thread:$0]  %s5, 2048, %s60, [#allocation9], 64, 64, 4
    $region25: #{tpu_custom_call.1} parent=1 // pred_fallthru
      _
    // Predicated region
    $region26: #{tpu_custom_call.1} parent=1 // pred_check
      _
    $region27: #{tpu_custom_call.1} parent=1 // pred_check_branch
      %67 = sbr.rel (0) target = $region29
    $region28: #{tpu_custom_call.1} parent=1 // pred_region
      _
    $region29: #{tpu_custom_call.1} parent=1 // pred_fallthru
      _
    // Predicated region
    $region30: #{tpu_custom_call.1} parent=1 // pred_check
      _
    $region31: #{tpu_custom_call.1} parent=1 // pred_check_branch
      %69 = sbr.rel (0) target = $region33
    $region32: #{tpu_custom_call.1} parent=1 // pred_region
      %70 = dma.done [#allocation3], 128
    $region33: #{tpu_custom_call.1} parent=1 // pred_fallthru
      _
    // Predicated region
    $region34: #{tpu_custom_call.1} parent=1 // pred_check
      _
    $region35: #{tpu_custom_call.1} parent=1 // pred_check_branch
      %72 = sbr.rel (0) target = $region37
    $region36: #{tpu_custom_call.1} parent=1 // pred_region
      %73 = dma.done [#allocation6], 2048
    $region37: #{tpu_custom_call.1} parent=1 // pred_fallthru
      _
    // Predicated region
    $region38: #{tpu_custom_call.1} parent=1 // pred_check
      _
    $region39: #{tpu_custom_call.1} parent=1 // pred_check_branch
      %75 = sbr.rel (0) target = $region41
    $region40: #{tpu_custom_call.1} parent=1 // pred_region
      %76 = dma.done [#allocation6], 2048
    $region41: #{tpu_custom_call.1} parent=1 // pred_fallthru
      _
    // Predicated region
    $region42: #{tpu_custom_call.1} parent=1 // pred_check
      _
    $region43: #{tpu_custom_call.1} parent=1 // pred_check_branch
      %78 = sbr.rel (0) target = $region45
    $region44: #{tpu_custom_call.1} parent=1 // pred_region
      %79 = dma.done [#allocation9], 2048
    $region45: #{tpu_custom_call.1} parent=1 // pred_fallthru
      _
    %v81 = vld [vmem:[#allocation2] sm:$0xff]
    %v82 = vld [vmem:[#allocation5] sm:$0xff]
    %v83 = vld [vmem:[#allocation5 + $0x8] sm:$0xff]
    %v84 = vld [vmem:[#allocation5 + $0x10] sm:$0xff]
    %v85 = vld [vmem:[#allocation5 + $0x18] sm:$0xff]
    %v86 = vld [vmem:[#allocation5 + $0x20] sm:$0xff]
    %v87 = vld [vmem:[#allocation5 + $0x28] sm:$0xff]
    %v88 = vld [vmem:[#allocation5 + $0x30] sm:$0xff]
    %v89 = vld [vmem:[#allocation5 + $0x38] sm:$0xff]
    %v90 = vld [vmem:[#allocation5 + $0x40] sm:$0xff]
    %v91 = vld [vmem:[#allocation5 + $0x48] sm:$0xff]
    %v92 = vld [vmem:[#allocation5 + $0x50] sm:$0xff]
    %v93 = vld [vmem:[#allocation5 + $0x58] sm:$0xff]
    %v94 = vld [vmem:[#allocation5 + $0x60] sm:$0xff]
    %v95 = vld [vmem:[#allocation5 + $0x68] sm:$0xff]
    %v96 = vld [vmem:[#allocation5 + $0x70] sm:$0xff]
    %v97 = vld [vmem:[#allocation5 + $0x78] sm:$0xff]
    %v98 = vld [vmem:[%s2] sm:$0x1]
    %v100 = vlaneseq
    %v101 = vshrl.u32 %v100, 7
    %v102 = vsub.s32 0, %v101
    %v103 = vrot.slane %v98, %v102
    %105 = vmatprep.subr.mxu0 0.0
    %106 = vmatpush1.msra.mxu0 %v82
    %107 = vmatprep.subr.mxu0 0.0
    %108 = vmatpush1.msra.mxu0 %v83
    %109 = vmatprep.subr.mxu0 0.0
    %110 = vmatpush1.msra.mxu0 %v84
    %111 = vmatprep.subr.mxu0 0.0
    %112 = vmatpush1.msra.mxu0 %v85
    %113 = vmatprep.subr.mxu0 0.0
    %114 = vmatpush1.msra.mxu0 %v86
    %115 = vmatprep.subr.mxu0 0.0
    %116 = vmatpush1.msra.mxu0 %v87
    %117 = vmatprep.subr.mxu0 0.0
    %118 = vmatpush1.msra.mxu0 %v88
    %119 = vmatprep.subr.mxu0 0.0
    %120 = vmatpush1.msra.mxu0 %v89
    %121 = vmatprep.subr.mxu0 0.0
    %122 = vmatpush1.msra.mxu0 %v90
    %123 = vmatprep.subr.mxu0 0.0
    %124 = vmatpush1.msra.mxu0 %v91
    %125 = vmatprep.subr.mxu0 0.0
    %126 = vmatpush1.msra.mxu0 %v92
    %127 = vmatprep.subr.mxu0 0.0
    %128 = vmatpush1.msra.mxu0 %v93
    %129 = vmatprep.subr.mxu0 0.0
    %130 = vmatpush1.msra.mxu0 %v94
    %131 = vmatprep.subr.mxu0 0.0
    %132 = vmatpush1.msra.mxu0 %v95
    %133 = vmatprep.subr.mxu0 0.0
    %134 = vmatpush1.msra.mxu0 %v96
    %135 = vmatprep.subr.mxu0 0.0
    %136 = vmatpush1.msra.mxu0 %v97
    %137 = vmatprep.subr.mxu0 0.0
    %138 = vmatpush1.msra.mxu0 0.0
    %139 = vmatprep.subr.mxu0 0.0
    %140 = vmatpush1.msra.mxu0 0.0
    %141 = vmatprep.subr.mxu0 0.0
    %142 = vmatpush1.msra.mxu0 0.0
    %143 = vmatprep.subr.mxu0 0.0
    %144 = vmatpush1.msra.mxu0 0.0
    %145 = vmatprep.subr.mxu0 0.0
    %146 = vmatpush1.msra.mxu0 0.0
    %147 = vmatprep.subr.mxu0 0.0
    %148 = vmatpush1.msra.mxu0 0.0
    %149 = vmatprep.subr.mxu0 0.0
    %150 = vmatpush1.msra.mxu0 0.0
    %151 = vmatprep.subr.mxu0 0.0
    %152 = vmatpush1.msra.mxu0 0.0
    %153 = vmatprep.subr.mxu0 0.0
    %154 = vmatpush1.msra.mxu0 0.0
    %155 = vmatprep.subr.mxu0 0.0
    %156 = vmatpush1.msra.mxu0 0.0
    %157 = vmatprep.subr.mxu0 0.0
    %158 = vmatpush1.msra.mxu0 0.0
    %159 = vmatprep.subr.mxu0 0.0
    %160 = vmatpush1.msra.mxu0 0.0
    %161 = vmatprep.subr.mxu0 0.0
    %162 = vmatpush1.msra.mxu0 0.0
    %163 = vmatprep.subr.mxu0 0.0
    %164 = vmatpush1.msra.mxu0 0.0
    %165 = vmatprep.subr.mxu0 0.0
    %166 = vmatpush1.msra.mxu0 0.0
    %167 = vmatprep.subr.mxu0 0.0
    %168 = vmatpush1.msra.mxu0 0.0
    %169 = vmatprep.mubr.f32.mxu0 0.0
    %170 = vmatmul.mubr.f32.gmra.mrb[0].mxu0 %v81
    %v171 = vpop.f32.mrb[0].mxu0
    %v172 = vadd.f32 %v103, %v171
    %v173 = vpop.f32.mrb[0].mxu0
    %174 = vdwg.mxu0
    %vm175 = vcmp.gt.f32.partialorder %v172, 0.0
    %v176 = vsel %vm175, 1, 0
    %v177 = vcvt.s32.f32 %v176
    %v178 = vmul.f32 %v81, %v177
    %v179 = vpack.c.bf16 %v178, %v178
    %v180 = vld [vmem:[#allocation7] sm:$0xff]
    %v181 = vld [vmem:[#allocation7 + $0x8] sm:$0xff]
    %v182 = vld [vmem:[#allocation7 + $0x10] sm:$0xff]
    %v183 = vld [vmem:[#allocation7 + $0x18] sm:$0xff]
    %v184 = vld [vmem:[#allocation7 + $0x20] sm:$0xff]
    %v185 = vld [vmem:[#allocation7 + $0x28] sm:$0xff]
    %v186 = vld [vmem:[#allocation7 + $0x30] sm:$0xff]
    %v187 = vld [vmem:[#allocation7 + $0x38] sm:$0xff]
    %v188 = vld [vmem:[#allocation7 + $0x40] sm:$0xff]
    %v189 = vld [vmem:[#allocation7 + $0x48] sm:$0xff]
    %v190 = vld [vmem:[#allocation7 + $0x50] sm:$0xff]
    %v191 = vld [vmem:[#allocation7 + $0x58] sm:$0xff]
    %v192 = vld [vmem:[#allocation7 + $0x60] sm:$0xff]
    %v193 = vld [vmem:[#allocation7 + $0x68] sm:$0xff]
    %v194 = vld [vmem:[#allocation7 + $0x70] sm:$0xff]
    %v195 = vld [vmem:[#allocation7 + $0x78] sm:$0xff]
    %v196 = vld [vmem:[%s4] sm:$0x3]
    %v198 = vlaneseq
    %v199 = vshrl.u32 %v198, 7
    %v200 = vsub.s32 0, %v199
    %v201 = vrot.slane %v196, %v200
    %v202 = vlaneseq
    %v203 = vshrl.u32 %v202, 7
    %v204 = vsub.s32 1, %v203
    %v205 = vrot.slane %v196, %v204
    %v224 = vunpack.c.l.b16 %v180
    %v225 = vunpack.c.h.b16 %v180
    %v226 = vunpack.c.l.b16 %v181
    %v227 = vunpack.c.h.b16 %v181
    %v228 = vunpack.c.l.b16 %v182
    %v229 = vunpack.c.h.b16 %v182
    %v230 = vunpack.c.l.b16 %v183
    %v231 = vunpack.c.h.b16 %v183
    %v232 = vunpack.c.l.b16 %v184
    %v233 = vunpack.c.h.b16 %v184
    %v234 = vunpack.c.l.b16 %v185
    %v235 = vunpack.c.h.b16 %v185
    %v236 = vunpack.c.l.b16 %v186
    %v237 = vunpack.c.h.b16 %v186
    %v238 = vunpack.c.l.b16 %v187
    %v239 = vunpack.c.h.b16 %v187
    %v240 = vunpack.c.l.b16 %v188
    %v241 = vunpack.c.h.b16 %v188
    %v242 = vunpack.c.l.b16 %v189
    %v243 = vunpack.c.h.b16 %v189
    %v244 = vunpack.c.l.b16 %v190
    %v245 = vunpack.c.h.b16 %v190
    %v246 = vunpack.c.l.b16 %v191
    %v247 = vunpack.c.h.b16 %v191
    %v248 = vunpack.c.l.b16 %v192
    %v249 = vunpack.c.h.b16 %v192
    %v250 = vunpack.c.l.b16 %v193
    %v251 = vunpack.c.h.b16 %v193
    %v252 = vunpack.c.l.b16 %v194
    %v253 = vunpack.c.h.b16 %v194
    %v254 = vunpack.c.l.b16 %v195
    %v255 = vunpack.c.h.b16 %v195
    %v256 = vpack.c.b16 %v226, %v224
    %v257 = vpack.c.b16 %v227, %v225
    %v258 = vpack.c.b16 %v230, %v228
    %v259 = vpack.c.b16 %v231, %v229
    %v260 = vpack.c.b16 %v234, %v232
    %v261 = vpack.c.b16 %v235, %v233
    %v262 = vpack.c.b16 %v238, %v236
    %v263 = vpack.c.b16 %v239, %v237
    %v264 = vpack.c.b16 %v242, %v240
    %v265 = vpack.c.b16 %v243, %v241
    %v266 = vpack.c.b16 %v246, %v244
    %v267 = vpack.c.b16 %v247, %v245
    %v268 = vpack.c.b16 %v250, %v248
    %v269 = vpack.c.b16 %v251, %v249
    %v270 = vpack.c.b16 %v254, %v252
    %v271 = vpack.c.b16 %v255, %v253
    %288 = vmatprep.subr.bf16.mxu0 %v257
    %289 = vmatpush1.bf16.msra.mxu0 %v256
    %290 = vmatprep.subr.bf16.mxu0 %v259
    %291 = vmatpush1.bf16.msra.mxu0 %v258
    %292 = vmatprep.subr.bf16.mxu0 %v261
    %293 = vmatpush1.bf16.msra.mxu0 %v260
    %294 = vmatprep.subr.bf16.mxu0 %v263
    %295 = vmatpush1.bf16.msra.mxu0 %v262
    %296 = vmatprep.subr.bf16.mxu0 %v265
    %297 = vmatpush1.bf16.msra.mxu0 %v264
    %298 = vmatprep.subr.bf16.mxu0 %v267
    %299 = vmatpush1.bf16.msra.mxu0 %v266
    %300 = vmatprep.subr.bf16.mxu0 %v269
    %301 = vmatpush1.bf16.msra.mxu0 %v268
    %302 = vmatprep.subr.bf16.mxu0 %v271
    %303 = vmatpush1.bf16.msra.mxu0 %v270
    %304 = vmatprep.subr.bf16.mxu0 0
    %305 = vmatpush1.bf16.msra.mxu0 0
    %306 = vmatprep.subr.bf16.mxu0 0
    %307 = vmatpush1.bf16.msra.mxu0 0
    %308 = vmatprep.subr.bf16.mxu0 0
    %309 = vmatpush1.bf16.msra.mxu0 0
    %310 = vmatprep.subr.bf16.mxu0 0
    %311 = vmatpush1.bf16.msra.mxu0 0
    %312 = vmatprep.subr.bf16.mxu0 0
    %313 = vmatpush1.bf16.msra.mxu0 0
    %314 = vmatprep.subr.bf16.mxu0 0
    %315 = vmatpush1.bf16.msra.mxu0 0
    %316 = vmatprep.subr.bf16.mxu0 0
    %317 = vmatpush1.bf16.msra.mxu0 0
    %318 = vmatprep.subr.bf16.mxu0 0
    %319 = vmatpush1.bf16.msra.mxu0 0
    %320 = vmatprep.mubr.bf16.mxu0 0
    %321 = vmatmul.mubr.bf16.gmra.mrb[0].mxu0 %v179
    %v322 = vpop.f32.mrb[0].mxu0
    %v323 = vadd.f32 %v201, %v322
    %v324 = vpop.f32.mrb[0].mxu0
    %v325 = vadd.f32 %v205, %v324
    %v326 = vpop.f32.mrb[0].mxu0
    %v327 = vpop.f32.mrb[0].mxu0
    %328 = vdwg.mxu0
    %v329 = vmax.f32 %v323, 0.0
    %v330 = vmax.f32 %v325, 0.0
    %v331 = vpack.c.bf16 %v329, %v329
    %v332 = vpack.c.bf16 %v330, %v330
    %v333 = vld [vmem:[#allocation8] sm:$0xf]
    %v334 = vld [vmem:[#allocation8 + $0x4] sm:$0xf]
    %v335 = vld [vmem:[#allocation8 + $0x8] sm:$0xf]
    %v336 = vld [vmem:[#allocation8 + $0xc] sm:$0xf]
    %v337 = vld [vmem:[#allocation8 + $0x10] sm:$0xf]
    %v338 = vld [vmem:[#allocation8 + $0x14] sm:$0xf]
    %v339 = vld [vmem:[#allocation8 + $0x18] sm:$0xf]
    %v340 = vld [vmem:[#allocation8 + $0x1c] sm:$0xf]
    %v341 = vld [vmem:[#allocation8 + $0x20] sm:$0xf]
    %v342 = vld [vmem:[#allocation8 + $0x24] sm:$0xf]
    %v343 = vld [vmem:[#allocation8 + $0x28] sm:$0xf]
    %v344 = vld [vmem:[#allocation8 + $0x2c] sm:$0xf]
    %v345 = vld [vmem:[#allocation8 + $0x30] sm:$0xf]
    %v346 = vld [vmem:[#allocation8 + $0x34] sm:$0xf]
    %v347 = vld [vmem:[#allocation8 + $0x38] sm:$0xf]
    %v348 = vld [vmem:[#allocation8 + $0x3c] sm:$0xf]
    %v349 = vld [vmem:[#allocation8 + $0x40] sm:$0xf]
    %v350 = vld [vmem:[#allocation8 + $0x44] sm:$0xf]
    %v351 = vld [vmem:[#allocation8 + $0x48] sm:$0xf]
    %v352 = vld [vmem:[#allocation8 + $0x4c] sm:$0xf]
    %v353 = vld [vmem:[#allocation8 + $0x50] sm:$0xf]
    %v354 = vld [vmem:[#allocation8 + $0x54] sm:$0xf]
    %v355 = vld [vmem:[#allocation8 + $0x58] sm:$0xf]
    %v356 = vld [vmem:[#allocation8 + $0x5c] sm:$0xf]
    %v357 = vld [vmem:[#allocation8 + $0x60] sm:$0xf]
    %v358 = vld [vmem:[#allocation8 + $0x64] sm:$0xf]
    %v359 = vld [vmem:[#allocation8 + $0x68] sm:$0xf]
    %v360 = vld [vmem:[#allocation8 + $0x6c] sm:$0xf]
    %v361 = vld [vmem:[#allocation8 + $0x70] sm:$0xf]
    %v362 = vld [vmem:[#allocation8 + $0x74] sm:$0xf]
    %v363 = vld [vmem:[#allocation8 + $0x78] sm:$0xf]
    %v364 = vld [vmem:[#allocation8 + $0x7c] sm:$0xf]
    %v365 = vld [vmem:[%s6] sm:$0x1]
    %v367 = vlaneseq
    %v368 = vshrl.u32 %v367, 7
    %v369 = vsub.s32 0, %v368
    %v370 = vrot.slane %v365, %v369
    %v404 = vunpack.c.l.b16 %v333
    %v405 = vunpack.c.l.b16 %v334
    %v406 = vunpack.c.l.b16 %v335
    %v407 = vunpack.c.l.b16 %v336
    %v408 = vunpack.c.l.b16 %v337
    %v409 = vunpack.c.l.b16 %v338
    %v410 = vunpack.c.l.b16 %v339
    %v411 = vunpack.c.l.b16 %v340
    %v412 = vunpack.c.l.b16 %v341
    %v413 = vunpack.c.l.b16 %v342
    %v414 = vunpack.c.l.b16 %v343
    %v415 = vunpack.c.l.b16 %v344
    %v416 = vunpack.c.l.b16 %v345
    %v417 = vunpack.c.l.b16 %v346
    %v418 = vunpack.c.l.b16 %v347
    %v419 = vunpack.c.l.b16 %v348
    %v420 = vunpack.c.l.b16 %v349
    %v421 = vunpack.c.l.b16 %v350
    %v422 = vunpack.c.l.b16 %v351
    %v423 = vunpack.c.l.b16 %v352
    %v424 = vunpack.c.l.b16 %v353
    %v425 = vunpack.c.l.b16 %v354
    %v426 = vunpack.c.l.b16 %v355
    %v427 = vunpack.c.l.b16 %v356
    %v428 = vunpack.c.l.b16 %v357
    %v429 = vunpack.c.l.b16 %v358
    %v430 = vunpack.c.l.b16 %v359
    %v431 = vunpack.c.l.b16 %v360
    %v432 = vunpack.c.l.b16 %v361
    %v433 = vunpack.c.l.b16 %v362
    %v434 = vunpack.c.l.b16 %v363
    %v435 = vunpack.c.l.b16 %v364
    %v436 = vpack.c.b16 %v405, %v404
    %v437 = vpack.c.b16 %v407, %v406
    %v438 = vpack.c.b16 %v409, %v408
    %v439 = vpack.c.b16 %v411, %v410
    %v440 = vpack.c.b16 %v413, %v412
    %v441 = vpack.c.b16 %v415, %v414
    %v442 = vpack.c.b16 %v417, %v416
    %v443 = vpack.c.b16 %v419, %v418
    %v444 = vpack.c.b16 %v421, %v420
    %v445 = vpack.c.b16 %v423, %v422
    %v446 = vpack.c.b16 %v425, %v424
    %v447 = vpack.c.b16 %v427, %v426
    %v448 = vpack.c.b16 %v429, %v428
    %v449 = vpack.c.b16 %v431, %v430
    %v450 = vpack.c.b16 %v433, %v432
    %v451 = vpack.c.b16 %v435, %v434
    %468 = vmatprep.subr.bf16.mxu0 0
    %469 = vmatpush1.bf16.msra.mxu0 %v436
    %470 = vmatprep.subr.bf16.mxu0 0
    %471 = vmatpush1.bf16.msra.mxu0 %v437
    %472 = vmatprep.subr.bf16.mxu0 0
    %473 = vmatpush1.bf16.msra.mxu0 %v438
    %474 = vmatprep.subr.bf16.mxu0 0
    %475 = vmatpush1.bf16.msra.mxu0 %v439
    %476 = vmatprep.subr.bf16.mxu0 0
    %477 = vmatpush1.bf16.msra.mxu0 %v440
    %478 = vmatprep.subr.bf16.mxu0 0
    %479 = vmatpush1.bf16.msra.mxu0 %v441
    %480 = vmatprep.subr.bf16.mxu0 0
    %481 = vmatpush1.bf16.msra.mxu0 %v442
    %482 = vmatprep.subr.bf16.mxu0 0
    %483 = vmatpush1.bf16.msra.mxu0 %v443
    %484 = vmatprep.subr.bf16.mxu0 0
    %485 = vmatpush1.bf16.msra.mxu0 %v444
    %486 = vmatprep.subr.bf16.mxu0 0
    %487 = vmatpush1.bf16.msra.mxu0 %v445
    %488 = vmatprep.subr.bf16.mxu0 0
    %489 = vmatpush1.bf16.msra.mxu0 %v446
    %490 = vmatprep.subr.bf16.mxu0 0
    %491 = vmatpush1.bf16.msra.mxu0 %v447
    %492 = vmatprep.subr.bf16.mxu0 0
    %493 = vmatpush1.bf16.msra.mxu0 %v448
    %494 = vmatprep.subr.bf16.mxu0 0
    %495 = vmatpush1.bf16.msra.mxu0 %v449
    %496 = vmatprep.subr.bf16.mxu0 0
    %497 = vmatpush1.bf16.msra.mxu0 %v450
    %498 = vmatprep.subr.bf16.mxu0 0
    %499 = vmatpush1.bf16.msra.mxu0 %v451
    %500 = vmatprep.mubr.bf16.mxu0 %v332
    %501 = vmatmul.mubr.bf16.gmra.mrb[0].mxu0 %v331
    %v502 = vpop.f32.mrb[0].mxu0
    %v503 = vadd.f32 %v370, %v502
    %v504 = vpop.f32.mrb[0].mxu0
    %v505 = vpop.f32.mrb[0].mxu0
    %v506 = vpop.f32.mrb[0].mxu0
    %507 = vdwg.mxu0
    %v508 = vmax.f32 %v503, 0.0
    %509 = vst [vmem:[#allocation10] sm:$0xff] %v508
    // Predicated region
    $region46: #{tpu_custom_call.1} parent=1 // pred_check
      _
    $region47: #{tpu_custom_call.1} parent=1 // pred_check_branch
      %511 = sbr.rel (0) target = $region49
    $region48: #{tpu_custom_call.1} parent=1 // pred_region
      %s513 = ssub.s32 128, 128
      %514 = vsyncadd [#allocation4], %s513
      %s516 = sshll.u32 [#allocation10], 4
      %s517 = int_to_ptr.vmem [resolvable:$true] %s516
      %519 = dma.vmem_to_hbm [thread:$0]  %s517, 128, %s7, [#allocation4]
    $region49: #{tpu_custom_call.1} parent=1 // pred_fallthru
      _
    // Predicated region
    $region50: #{tpu_custom_call.1} parent=1 // pred_check
      _
    $region51: #{tpu_custom_call.1} parent=1 // pred_check_branch
      %521 = sbr.rel (0) target = $region53
    $region52: #{tpu_custom_call.1} parent=1 // pred_region
      %522 = dma.done [#allocation4], 128
    $region53: #{tpu_custom_call.1} parent=1 // pred_fallthru
      _
    %523 = vsyncpa [#allocation3], 1
    %524 = vsyncpa [#allocation6], 1
    %525 = vsyncpa [#allocation9], 1
    %526 = vsyncpa [#allocation4], 1

</llo_original>
